<compile_context>
chip_gen: v6e
topology: v6e:2x2x1
jax: 0.10.0
libtpu: 0.0.40
codegen_flags: <defaults>
</compile_context>

<pallas_src>
import functools

import jax
import jax.numpy as jnp
from jax.experimental import pallas as pl
from jax.experimental.pallas import tpu as pltpu


LANE = 128                 # channel dims padded to lane width
SUBLANE_BF16 = 16          # bf16 packs 16 rows per sublane group -> 16-align row tiles
TM_PREF = 512              # target-row tile
TK_PREF = 2048             # source (reduction) tile
P_RESIDENT_MAX_BYTES = 12 * 1024 * 1024   # keep full projected-src table VMEM-resident below this
VMEM_LIMIT_FLOOR = 32 * 1024 * 1024
VMEM_LIMIT_CAP = 48 * 1024 * 1024         # leave headroom on v7x's 64 MiB physical VMEM


def _round_up(n, m):
    return ((n + m - 1) // m) * m


def _choose_tm(n_tgt, pref=TM_PREF):
    """Target-row tile: 16-aligned; prefer >=2 tiles so the parallel grid axis can shard
    across v7x's two TensorCores (harmless single tile for tiny sampled subgraphs)."""
    n_al = _round_up(max(n_tgt, 1), SUBLANE_BF16)
    if n_al <= 2 * pref:
        half = _round_up(-(-n_al // 2), SUBLANE_BF16)
        if half < n_al:
            return half, 2 * half
        return n_al, n_al
    return pref, _round_up(n_tgt, pref)


def _choose_tk(n_src, pref=TK_PREF):
    n_al = _round_up(max(n_src, 1), LANE)
    if n_al <= pref:
        return n_al, n_al
    return pref, _round_up(n_src, pref)


def _proj_row_tile(n_rows_pad, pref=512):
    for t in (pref, 384, 256, 128):
        if t <= n_rows_pad and n_rows_pad % t == 0:
            return t
    return n_rows_pad


def _fit2(x, rows, cols):
    """Slice/zero-pad a 2-D array to exactly (rows, cols)."""
    x = x[: min(x.shape[0], rows), : min(x.shape[1], cols)]
    pr, pc = rows - x.shape[0], cols - x.shape[1]
    if pr or pc:
        x = jnp.pad(x, ((0, pr), (0, pc)))
    return x


# ----------------------------------------------------------------------------
# Kernel 1: row-tiled projection  p_src = x_src @ W_l   (bf16 in, bf16 out, f32 acc)
# ----------------------------------------------------------------------------
def _project_kernel(x_ref, w_ref, o_ref):
    o_ref[...] = jnp.dot(x_ref[...], w_ref[...],
                         preferred_element_type=jnp.float32).astype(o_ref.dtype)


def pallas_project(x_bf16, w_bf16, *, row_tile):
    n, c_in = x_bf16.shape
    c_out = w_bf16.shape[1]
    return pl.pallas_call(
        _project_kernel,
        out_shape=jax.ShapeDtypeStruct((n, c_out), jnp.bfloat16),
        grid_spec=pltpu.PrefetchScalarGridSpec(
            num_scalar_prefetch=0,
            grid=(n // row_tile,),
            in_specs=[
                pl.BlockSpec((row_tile, c_in), lambda i: (i, 0)),
                pl.BlockSpec((c_in, c_out), lambda i: (0, 0)),     # W resident
            ],
            out_specs=pl.BlockSpec((row_tile, c_out), lambda i: (i, 0)),
        ),
        compiler_params=pltpu.CompilerParams(dimension_semantics=("parallel",)),
    )(x_bf16, w_bf16)


# ----------------------------------------------------------------------------
# Kernel 2: tiled mean-aggregation matmul + fused root-term / bias / ReLU / log_softmax
#   grid = (target tiles [parallel], source tiles [arbitrary / reduction])
# ----------------------------------------------------------------------------
def _aggregate_kernel(a_ref, p_ref, xt_ref, wr_ref, b_ref, dinv_ref, o_ref, acc_ref,
                      *, mode, c_valid, p_resident, tk):
    k = pl.program_id(1)

    @pl.when(k == 0)
    def _():
        acc_ref[...] = jnp.zeros_like(acc_ref)

    if p_resident:
        # full projected-src table resident in VMEM; slice the k-th (tk, C) panel
        start = pl.multiple_of(k * tk, LANE)
        p_blk = p_ref[pl.ds(start, tk), :]
    else:
        p_blk = p_ref[...]

    # bf16 x bf16 -> f32 accumulate on the MXU (A stream is the dominant HBM traffic)
    acc_ref[...] += jnp.dot(a_ref[...], p_blk, preferred_element_type=jnp.float32)

    @pl.when(k == pl.num_programs(1) - 1)
    def _():
        # mean = (counts-weighted sum) * 1/deg, in f32 (counts were exact bf16 integers)
        agg = acc_ref[...] * dinv_ref[...]
        # hoisted root term (x_tgt @ W_r) + bias, computed once per target tile
        root = jnp.dot(xt_ref[...], wr_ref[...], preferred_element_type=jnp.float32)
        h = agg + root + b_ref[...]
        if mode == "relu":
            h = jnp.maximum(h, 0.0)
        else:  # masked, numerically stable log_softmax over the valid channels only
            col = jax.lax.broadcasted_iota(jnp.int32, h.shape, 1)
            h = jnp.where(col < c_valid, h, -1e30)
            m = jnp.max(h, axis=-1, keepdims=True)
            z = h - m
            lse = jnp.log(jnp.sum(jnp.exp(z), axis=-1, keepdims=True))
            h = z - lse
        o_ref[...] = h.astype(o_ref.dtype)


def pallas_aggregate(A, p_src, x_tgt, w_r, bias, dinv, *, tm, tk, mode, c_valid, out_dtype):
    n_tgt_pad, n_src_pad = A.shape
    c_pad = p_src.shape[1]
    c_in_pad = x_tgt.shape[1]

    p_bytes = p_src.size * p_src.dtype.itemsize
    p_resident = p_bytes <= P_RESIDENT_MAX_BYTES
    if p_resident:
        p_spec = pl.BlockSpec((n_src_pad, c_pad), lambda i, k: (0, 0))   # loaded once
    else:
        p_spec = pl.BlockSpec((tk, c_pad), lambda i, k: (k, 0))          # streamed per k

    out_isz = jnp.dtype(out_dtype).itemsize
    # conservative (double-buffered) VMEM footprint estimate
    est = (2 * tm * tk * 2
           + (2 * p_bytes if p_resident else 2 * tk * c_pad * 2)
           + 2 * tm * c_in_pad * 2
           + 2 * c_in_pad * c_pad * 2
           + 2 * c_pad * 4
           + 2 * tm * LANE * 4
           + 2 * tm * c_pad * out_isz
           + tm * c_pad * 4)
    vmem_limit = min(VMEM_LIMIT_CAP,
                     max(VMEM_LIMIT_FLOOR, _round_up(int(est * 1.25) + (1 << 20), 1 << 20)))

    kernel = functools.partial(_aggregate_kernel, mode=mode, c_valid=c_valid,
                               p_resident=p_resident, tk=tk)
    return pl.pallas_call(
        kernel,
        out_shape=jax.ShapeDtypeStruct((n_tgt_pad, c_pad), out_dtype),
        grid_spec=pltpu.PrefetchScalarGridSpec(
            num_scalar_prefetch=0,
            grid=(n_tgt_pad // tm, n_src_pad // tk),
            in_specs=[
                pl.BlockSpec((tm, tk), lambda i, k: (i, k)),          # A counts (bf16)
                p_spec,                                               # projected src feats (bf16)
                pl.BlockSpec((tm, c_in_pad), lambda i, k: (i, 0)),    # x_tgt tile (bf16)
                pl.BlockSpec((c_in_pad, c_pad), lambda i, k: (0, 0)), # W_r resident (bf16)
                pl.BlockSpec((1, c_pad), lambda i, k: (0, 0)),        # bias (f32)
                pl.BlockSpec((tm, 1), lambda i, k: (i, 0)),           # 1/deg (f32)
            ],
            out_specs=pl.BlockSpec((tm, c_pad), lambda i, k: (i, 0)),
            # f32 accumulator scratch is kept (output may be bf16 for intermediate layers)
            scratch_shapes=[pltpu.VMEM((tm, c_pad), jnp.float32)],
        ),
        compiler_params=pltpu.CompilerParams(
            dimension_semantics=("parallel", "arbitrary"),
            vmem_limit_bytes=vmem_limit,
        ),
    )(A, p_src, x_tgt, w_r, bias, dinv)


# ----------------------------------------------------------------------------
# Glue: dense {0,1,..} neighbor-count adjacency (bf16) + exact f32 1/degree vector
# ----------------------------------------------------------------------------
def build_count_adjacency(edge_index, n_src_pad, n_tgt_pad):
    src = edge_index[0]                      # message sources (indices into x_src)
    tgt = edge_index[1]                      # message targets (indices into x_tgt)
    counts = jnp.zeros((n_tgt_pad, n_src_pad), jnp.float32).at[tgt, src].add(1.0)
    deg = jnp.sum(counts, axis=1, keepdims=True)
    dinv = 1.0 / jnp.maximum(deg, 1.0)       # isolated targets aggregate to 0 (PyG behavior)
    return counts.astype(jnp.bfloat16), dinv  # small integer counts are exact in bf16


# ----------------------------------------------------------------------------
# One fused SAGEConv layer:  out = mean_j(x_j) @ W_l + b + x_i @ W_r  (+ ReLU / log_softmax)
# ----------------------------------------------------------------------------
def sage_layer(edge_index, x, n_src, n_tgt, w_l, b_l, w_r, *, mode, out_dtype):
    c_in, c_out = w_l.shape
    c_in_pad = _round_up(c_in, LANE)
    c_out_pad = _round_up(c_out, LANE)
    tm, n_tgt_pad = _choose_tm(n_tgt)
    tk, n_src_pad = _choose_tk(n_src)

    # bf16 MXU inputs (f32 accumulation inside the kernels)
    x_src = _fit2(x, n_src_pad, c_in_pad).astype(jnp.bfloat16)
    x_tgt = _fit2(x[:n_tgt], n_tgt_pad, c_in_pad).astype(jnp.bfloat16)
    wl_p = _fit2(w_l.astype(jnp.float32), c_in_pad, c_out_pad).astype(jnp.bfloat16)
    wr_p = _fit2(w_r.astype(jnp.float32), c_in_pad, c_out_pad).astype(jnp.bfloat16)
    bl_p = jnp.pad(b_l.astype(jnp.float32), (0, c_out_pad - c_out)).reshape(1, -1)

    A, dinv = build_count_adjacency(edge_index, n_src_pad, n_tgt_pad)

    # Reassociated (A @ x) @ W -> A @ (x @ W): the big matmul contracts against only
    # c_out_pad columns; root term + bias are added once in the aggregation epilogue.
    p_src = pallas_project(x_src, wl_p, row_tile=_proj_row_tile(n_src_pad))
    out = pallas_aggregate(A, p_src, x_tgt, wr_p, bl_p, dinv,
                           tm=tm, tk=tk, mode=mode, c_valid=c_out, out_dtype=out_dtype)
    return out   # padded (n_tgt_pad, c_out_pad); padded channels are exact zeros after ReLU


# ----------------------------------------------------------------------------
# SAGEClassic forward (mirrors the PyTorch loop structure)
# ----------------------------------------------------------------------------
def sage_classic_forward(x, adjs, params):
    num_layers = len(params)
    x = x.astype(jnp.float32)                # mirrors x.to(torch.float)
    n_tgt_final = c_out_final = None
    for i, (edge_index, _, size) in enumerate(adjs):
        n_src, n_tgt = size
        w_l, b_l, w_r = params[i]
        last = (i == num_layers - 1)
        mode = "log_softmax" if last else "relu"
        out_dtype = jnp.float32 if last else jnp.bfloat16   # bf16 inter-layer activations
        x = sage_layer(edge_index, x, n_src, n_tgt, w_l, b_l, w_r,
                       mode=mode, out_dtype=out_dtype)
        n_tgt_final, c_out_final = n_tgt, w_l.shape[1]
    return x[:n_tgt_final, :c_out_final]


def init_params(key, in_channels, hidden_channels, out_channels, num_layers):
    """Deterministic synthetic weights. W stored as [c_in, c_out]."""
    dims = [in_channels] + [hidden_channels] * (num_layers - 1) + [out_channels]
    params = []
    for i in range(num_layers):
        c_in, c_out = dims[i], dims[i + 1]
        key, k1, k2 = jax.random.split(key, 3)
        scale = 1.0 / jnp.sqrt(jnp.float32(c_in))
        w_l = jax.random.normal(k1, (c_in, c_out), jnp.float32) * scale
        b_l = jnp.zeros((c_out,), jnp.float32)
        w_r = jax.random.normal(k2, (c_in, c_out), jnp.float32) * scale
        params.append((w_l, b_l, w_r))
    return params


if __name__ == "__main__":
    key = jax.random.PRNGKey(0)

    in_channels, hidden_channels, out_channels = 16, 32, 8
    num_layers = 2
    n0, n1, n2 = 16, 8, 4          # sampled-node counts per hop (targets are a prefix)

    # node features for the outermost sampled set
    key, kx = jax.random.split(key)
    x = jax.random.normal(kx, (n0, in_channels), jnp.float32)

    # adjs: list of (edge_index, e_id, size) exactly like PyG NeighborSampler output
    key, ks0, kt0, ks1, kt1 = jax.random.split(key, 5)
    e0 = 32
    edge_index0 = jnp.stack([
        jax.random.randint(ks0, (e0,), 0, n0),   # sources into x (n0 nodes)
        jax.random.randint(kt0, (e0,), 0, n1),   # targets into x[:n1]
    ])
    e1 = 12
    edge_index1 = jnp.stack([
        jax.random.randint(ks1, (e1,), 0, n1),
        jax.random.randint(kt1, (e1,), 0, n2),
    ])
    adjs = [
        (edge_index0, None, (n0, n1)),
        (edge_index1, None, (n1, n2)),
    ]

    params = init_params(key, in_channels, hidden_channels, out_channels, num_layers)

    out = sage_classic_forward(x, adjs, params)
    out = jax.block_until_ready(out)

    assert out.shape == (n2, out_channels)
    assert out.dtype == jnp.float32
    # rows of log_softmax must sum (in prob space) to 1
    assert jnp.allclose(jnp.sum(jnp.exp(out), axis=-1), 1.0, atol=1e-4)

    print("KERNEL_OK")
</pallas_src>

<mosaic_0001>
module attributes {stable_mosaic.version = 11 : i64} {
  func.func @_project_kernel(%arg0: i32, %arg1: memref<128x128xbf16, #tpu.memory_space<vmem>>, %arg2: memref<128x128xbf16, #tpu.memory_space<vmem>>, %arg3: memref<128x128xbf16, #tpu.memory_space<vmem>>) attributes {dimension_semantics = [#tpu.dimension_semantics<parallel>], iteration_bounds = array<i64: 1>, scalar_prefetch = 0 : i64, scratch_operands = 0 : i64, tpu.core_type = #tpu.core_type<tc>, window_params = [{transform_indices = @transform_0, window_bounds = array<i64: 128, 128>}, {pipeline_mode = #tpu.pipeline_mode<synchronous>, transform_indices = @transform_1, window_bounds = array<i64: 128, 128>}, {transform_indices = @transform_2, window_bounds = array<i64: 128, 128>}]} {
    %c0 = arith.constant 0 : index
    %c0_0 = arith.constant 0 : index
    %0 = vector.load %arg1[%c0, %c0_0] : memref<128x128xbf16, #tpu.memory_space<vmem>>, vector<128x128xbf16>
    %c0_1 = arith.constant 0 : index
    %c0_2 = arith.constant 0 : index
    %1 = vector.load %arg2[%c0_1, %c0_2] : memref<128x128xbf16, #tpu.memory_space<vmem>>, vector<128x128xbf16>
    %cst = arith.constant dense<0.000000e+00> : vector<128x128xf32>
    %2 = tpu.matmul %0, %1, %cst {dimension_numbers = #tpu.dot_dimension_numbers<[1], [0], [0], [1], [0, 0, 1, 1], [], []>} : vector<128x128xbf16>, vector<128x128xbf16>, vector<128x128xf32> -> vector<128x128xf32>
    %3 = arith.truncf %2 : vector<128x128xf32> to vector<128x128xbf16>
    %c0_3 = arith.constant 0 : index
    %c0_4 = arith.constant 0 : index
    %4 = vector.load %arg3[%c0_3, %c0_4] : memref<128x128xbf16, #tpu.memory_space<vmem>>, vector<128x128xbf16>
    tpu.vector_store %arg3[%c0_3, %c0_4], %3 {strides = array<i32>} : memref<128x128xbf16, #tpu.memory_space<vmem>>, vector<128x128xbf16>,
    return
  }
  func.func @transform_0(%arg0: i32) -> (i32, i32) {
    %c0_i32 = arith.constant 0 : i32
    %c0_i32_0 = arith.constant 0 : i32
    return %arg0, %c0_i32 : i32, i32
  }
  func.func @transform_1(%arg0: i32) -> (i32, i32) {
    %c0_i32 = arith.constant 0 : i32
    %c0_i32_0 = arith.constant 0 : i32
    %c0_i32_1 = arith.constant 0 : i32
    return %c0_i32, %c0_i32_0 : i32, i32
  }
  func.func @transform_2(%arg0: i32) -> (i32, i32) {
    %c0_i32 = arith.constant 0 : i32
    %c0_i32_0 = arith.constant 0 : i32
    return %arg0, %c0_i32 : i32, i32
  }
}

</mosaic_0001>

<llo_original>
// kernel: tpu_custom_call.1
$region0: #{tpu_custom_call.1}
  #allocation0 [shape = 'u32[]', space=smem, size = 0x4, offset = 0x4, fixed_abs, tag = 'smem constant byte address 0x4 - core index']
  #allocation1 [shape = 'u32[144,128]{1,0:T(1,128)}', space=vmem, size = 0x12000, scoped, tag = 'internal scratch']
  %s0 = inlined_call_operand.hbm [shape: bf16[128,128], index: 0, kind: input, shape index: {}]
  %s1 = inlined_call_operand.hbm [shape: bf16[128,128], index: 1, kind: input, shape index: {}]
  %s2 = inlined_call_operand.hbm [shape: bf16[128,128], index: 2, kind: output, shape index: {}]
  %s3 = sld [smem:[#allocation0]]
  $region26: #{tpu_custom_call.1} parent=0
    _
  %s5 = ssub.s32 1, %s3
  %s6 = scalar_select 0, %s5, %s3
  $region1: #{tpu_custom_call.1} parent=0
    #allocation2 [shape = 'u8[32768]{0}', space=vmem, size = 0x8000, scoped, tag = 'input window, operand 0, single buffered']
    #allocation3 [shape = 's32[1]{0}', space=sflag, size = 0x4, scoped, tag = 'scoped memory for tpu_custom_call.1']
    #allocation4 [shape = 's32[1]{0}', space=sflag, size = 0x4, scoped, tag = 'scoped memory for tpu_custom_call.1']
    #allocation5 [shape = 'u8[32768]{0}', space=vmem, size = 0x8000, scoped, tag = 'input window, operand 1, single buffered']
    #allocation6 [shape = 's32[1]{0}', space=sflag, size = 0x4, scoped, tag = 'scoped memory for tpu_custom_call.1']
    #allocation7 [shape = 'u8[32768]{0}', space=vmem, size = 0x8000, scoped, tag = 'output window, operand 0, single buffered']
    %7 = vsyncpa [#allocation3], 0
    %8 = vsyncpa [#allocation6], 0
    %9 = vsyncpa [#allocation4], 0
    // Predicated region
    $region2: #{tpu_custom_call.1} parent=1 // pred_check
      _
    $region3: #{tpu_custom_call.1} parent=1 // pred_check_branch
      %11 = sbr.rel (0) target = $region5
    $region4: #{tpu_custom_call.1} parent=1 // pred_region
      %s13 = ssub.s32 1024, 1024
      %14 = vsyncadd [#allocation3], %s13
      %s15 = sshll.u32 [#allocation2], 4
      %s16 = int_to_ptr.vmem [resolvable:$true] %s15
      %21 = dma.hbm_to_vmem [thread:$0]  %s0, 1024, %s16, [#allocation3], 64, 64, 4
    $region5: #{tpu_custom_call.1} parent=1 // pred_fallthru
      _
    // Predicated region
    $region6: #{tpu_custom_call.1} parent=1 // pred_check
      _
    $region7: #{tpu_custom_call.1} parent=1 // pred_check_branch
      %23 = sbr.rel (0) target = $region9
    $region8: #{tpu_custom_call.1} parent=1 // pred_region
      %s25 = ssub.s32 1024, 1024
      %26 = vsyncadd [#allocation6], %s25
      %s27 = sshll.u32 [#allocation5], 4
      %s28 = int_to_ptr.vmem [resolvable:$true] %s27
      %33 = dma.hbm_to_vmem [thread:$0]  %s1, 1024, %s28, [#allocation6], 64, 64, 4
    $region9: #{tpu_custom_call.1} parent=1 // pred_fallthru
      _
    // Predicated region
    $region10: #{tpu_custom_call.1} parent=1 // pred_check
      _
    $region11: #{tpu_custom_call.1} parent=1 // pred_check_branch
      %35 = sbr.rel (0) target = $region13
    $region12: #{tpu_custom_call.1} parent=1 // pred_region
      %36 = dma.done [#allocation3], 1024
    $region13: #{tpu_custom_call.1} parent=1 // pred_fallthru
      _
    // Predicated region
    $region14: #{tpu_custom_call.1} parent=1 // pred_check
      _
    $region15: #{tpu_custom_call.1} parent=1 // pred_check_branch
      %38 = sbr.rel (0) target = $region17
    $region16: #{tpu_custom_call.1} parent=1 // pred_region
      %39 = dma.done [#allocation6], 1024
    $region17: #{tpu_custom_call.1} parent=1 // pred_fallthru
      _
    %v41 = vld [vmem:[#allocation2] sm:$0xf]
    %v42 = vld [vmem:[#allocation2 + $0x4] sm:$0xf]
    %v43 = vld [vmem:[#allocation2 + $0x8] sm:$0xf]
    %v44 = vld [vmem:[#allocation2 + $0xc] sm:$0xf]
    %v45 = vld [vmem:[#allocation2 + $0x10] sm:$0xf]
    %v46 = vld [vmem:[#allocation2 + $0x14] sm:$0xf]
    %v47 = vld [vmem:[#allocation2 + $0x18] sm:$0xf]
    %v48 = vld [vmem:[#allocation2 + $0x1c] sm:$0xf]
    %v49 = vld [vmem:[#allocation2 + $0x20] sm:$0xf]
    %v50 = vld [vmem:[#allocation2 + $0x24] sm:$0xf]
    %v51 = vld [vmem:[#allocation2 + $0x28] sm:$0xf]
    %v52 = vld [vmem:[#allocation2 + $0x2c] sm:$0xf]
    %v53 = vld [vmem:[#allocation2 + $0x30] sm:$0xf]
    %v54 = vld [vmem:[#allocation2 + $0x34] sm:$0xf]
    %v55 = vld [vmem:[#allocation2 + $0x38] sm:$0xf]
    %v56 = vld [vmem:[#allocation2 + $0x3c] sm:$0xf]
    %v57 = vld [vmem:[#allocation5] sm:$0xf]
    %v58 = vld [vmem:[#allocation5 + $0x4] sm:$0xf]
    %v59 = vld [vmem:[#allocation5 + $0x8] sm:$0xf]
    %v60 = vld [vmem:[#allocation5 + $0xc] sm:$0xf]
    %v61 = vld [vmem:[#allocation5 + $0x10] sm:$0xf]
    %v62 = vld [vmem:[#allocation5 + $0x14] sm:$0xf]
    %v63 = vld [vmem:[#allocation5 + $0x18] sm:$0xf]
    %v64 = vld [vmem:[#allocation5 + $0x1c] sm:$0xf]
    %v65 = vld [vmem:[#allocation5 + $0x20] sm:$0xf]
    %v66 = vld [vmem:[#allocation5 + $0x24] sm:$0xf]
    %v67 = vld [vmem:[#allocation5 + $0x28] sm:$0xf]
    %v68 = vld [vmem:[#allocation5 + $0x2c] sm:$0xf]
    %v69 = vld [vmem:[#allocation5 + $0x30] sm:$0xf]
    %v70 = vld [vmem:[#allocation5 + $0x34] sm:$0xf]
    %v71 = vld [vmem:[#allocation5 + $0x38] sm:$0xf]
    %v72 = vld [vmem:[#allocation5 + $0x3c] sm:$0xf]
    %v89 = vunpack.c.l.b16 %v41
    %v90 = vunpack.c.l.b16 %v42
    %v91 = vunpack.c.l.b16 %v43
    %v92 = vunpack.c.l.b16 %v44
    %v93 = vunpack.c.l.b16 %v45
    %v94 = vunpack.c.l.b16 %v46
    %v95 = vunpack.c.l.b16 %v47
    %v96 = vunpack.c.l.b16 %v48
    %v97 = vunpack.c.l.b16 %v49
    %v98 = vunpack.c.l.b16 %v50
    %v99 = vunpack.c.l.b16 %v51
    %v100 = vunpack.c.l.b16 %v52
    %v101 = vunpack.c.l.b16 %v53
    %v102 = vunpack.c.l.b16 %v54
    %v103 = vunpack.c.l.b16 %v55
    %v104 = vunpack.c.l.b16 %v56
    %v105 = vpack.c.b16 %v90, %v89
    %v106 = vpack.c.b16 %v92, %v91
    %v107 = vpack.c.b16 %v94, %v93
    %v108 = vpack.c.b16 %v96, %v95
    %v109 = vpack.c.b16 %v98, %v97
    %v110 = vpack.c.b16 %v100, %v99
    %v111 = vpack.c.b16 %v102, %v101
    %v112 = vpack.c.b16 %v104, %v103
    %v137 = vunpack.c.l.b16 %v57
    %v138 = vunpack.c.l.b16 %v58
    %v139 = vunpack.c.l.b16 %v59
    %v140 = vunpack.c.l.b16 %v60
    %v141 = vunpack.c.l.b16 %v61
    %v142 = vunpack.c.l.b16 %v62
    %v143 = vunpack.c.l.b16 %v63
    %v144 = vunpack.c.l.b16 %v64
    %v145 = vunpack.c.l.b16 %v65
    %v146 = vunpack.c.l.b16 %v66
    %v147 = vunpack.c.l.b16 %v67
    %v148 = vunpack.c.l.b16 %v68
    %v149 = vunpack.c.l.b16 %v69
    %v150 = vunpack.c.l.b16 %v70
    %v151 = vunpack.c.l.b16 %v71
    %v152 = vunpack.c.l.b16 %v72
    %v153 = vpack.c.b16 %v138, %v137
    %v154 = vpack.c.b16 %v140, %v139
    %v155 = vpack.c.b16 %v142, %v141
    %v156 = vpack.c.b16 %v144, %v143
    %v157 = vpack.c.b16 %v146, %v145
    %v158 = vpack.c.b16 %v148, %v147
    %v159 = vpack.c.b16 %v150, %v149
    %v160 = vpack.c.b16 %v152, %v151
    %169 = vmatprep.subr.bf16.mxu0 0
    %170 = vmatpush1.bf16.msra.mxu0 %v160
    %171 = vmatprep.subr.bf16.mxu0 0
    %172 = vmatpush1.bf16.msra.mxu0 %v159
    %173 = vmatprep.subr.bf16.mxu0 0
    %174 = vmatpush1.bf16.msra.mxu0 %v158
    %175 = vmatprep.subr.bf16.mxu0 0
    %176 = vmatpush1.bf16.msra.mxu0 %v157
    %177 = vmatprep.subr.bf16.mxu0 0
    %178 = vmatpush1.bf16.msra.mxu0 %v156
    %179 = vmatprep.subr.bf16.mxu0 0
    %180 = vmatpush1.bf16.msra.mxu0 %v155
    %181 = vmatprep.subr.bf16.mxu0 0
    %182 = vmatpush1.bf16.msra.mxu0 %v154
    %183 = vmatprep.subr.bf16.mxu0 0
    %184 = vmatpush1.bf16.msra.mxu0 %v153
    %185 = vmatprep.subr.bf16.mxu0 0
    %186 = vmatpush2.bf16.msra.mxu0 0
    %187 = vmatprep.subr.bf16.mxu0 0
    %188 = vmatpush2.bf16.msra.mxu0 0
    %189 = vmatprep.subr.bf16.mxu0 0
    %190 = vmatpush2.bf16.msra.mxu0 0
    %191 = vmatprep.subr.bf16.mxu0 0
    %192 = vmatpush2.bf16.msra.mxu0 0
    %193 = vmatprep.subr.bf16.mxu0 0
    %194 = vmatpush2.bf16.msra.mxu0 0
    %195 = vmatprep.subr.bf16.mxu0 0
    %196 = vmatpush2.bf16.msra.mxu0 0
    %197 = vmatprep.subr.bf16.mxu0 0
    %198 = vmatpush2.bf16.msra.mxu0 0
    %199 = vmatprep.subr.bf16.mxu0 0
    %200 = vmatpush2.bf16.msra.mxu0 0
    %201 = vmatprep.mubr.bf16.mxu0 0
    %202 = vmatmul.mubr.bf16.gmra.mxu0 %v105
    %v203 = vpop.f32.mrf.mxu0
    %v204 = vadd.f32 0.0, %v203
    %v205 = vpop.f32.mrf.mxu0
    %v206 = vpop.f32.mrf.mxu0
    %v207 = vadd.f32 0.0, %v206
    %v208 = vpop.f32.mrf.mxu0
    %209 = vmatprep.mubr.bf16.mxu0 0
    %210 = vmatmul.mubr.bf16.gmra.mxu0 %v106
    %v211 = vpop.f32.mrf.mxu0
    %v212 = vadd.f32 0.0, %v211
    %v213 = vpop.f32.mrf.mxu0
    %v214 = vpop.f32.mrf.mxu0
    %v215 = vadd.f32 0.0, %v214
    %v216 = vpop.f32.mrf.mxu0
    %217 = vmatprep.mubr.bf16.mxu0 0
    %218 = vmatmul.mubr.bf16.gmra.mxu0 %v107
    %v219 = vpop.f32.mrf.mxu0
    %v220 = vadd.f32 0.0, %v219
    %v221 = vpop.f32.mrf.mxu0
    %v222 = vpop.f32.mrf.mxu0
    %v223 = vadd.f32 0.0, %v222
    %v224 = vpop.f32.mrf.mxu0
    %225 = vmatprep.mubr.bf16.mxu0 0
    %226 = vmatmul.mubr.bf16.gmra.mxu0 %v108
    %v227 = vpop.f32.mrf.mxu0
    %v228 = vadd.f32 0.0, %v227
    %v229 = vpop.f32.mrf.mxu0
    %v230 = vpop.f32.mrf.mxu0
    %v231 = vadd.f32 0.0, %v230
    %v232 = vpop.f32.mrf.mxu0
    %233 = vmatprep.mubr.bf16.mxu0 0
    %234 = vmatmul.mubr.bf16.gmra.mxu0 %v109
    %v235 = vpop.f32.mrf.mxu0
    %v236 = vadd.f32 0.0, %v235
    %v237 = vpop.f32.mrf.mxu0
    %v238 = vpop.f32.mrf.mxu0
    %v239 = vadd.f32 0.0, %v238
    %v240 = vpop.f32.mrf.mxu0
    %241 = vmatprep.mubr.bf16.mxu0 0
    %242 = vmatmul.mubr.bf16.gmra.mxu0 %v110
    %v243 = vpop.f32.mrf.mxu0
    %v244 = vadd.f32 0.0, %v243
    %v245 = vpop.f32.mrf.mxu0
    %v246 = vpop.f32.mrf.mxu0
    %v247 = vadd.f32 0.0, %v246
    %v248 = vpop.f32.mrf.mxu0
    %249 = vmatprep.mubr.bf16.mxu0 0
    %250 = vmatmul.mubr.bf16.gmra.mxu0 %v111
    %v251 = vpop.f32.mrf.mxu0
    %v252 = vadd.f32 0.0, %v251
    %v253 = vpop.f32.mrf.mxu0
    %v254 = vpop.f32.mrf.mxu0
    %v255 = vadd.f32 0.0, %v254
    %v256 = vpop.f32.mrf.mxu0
    %257 = vmatprep.mubr.bf16.mxu0 0
    %258 = vmatmul.mubr.bf16.gmra.mxu0 %v112
    %v259 = vpop.f32.mrf.mxu0
    %v260 = vadd.f32 0.0, %v259
    %v261 = vpop.f32.mrf.mxu0
    %v262 = vpop.f32.mrf.mxu0
    %v263 = vadd.f32 0.0, %v262
    %v264 = vpop.f32.mrf.mxu0
    %265 = vdwg.mxu0
    %v266 = vpack.c.bf16 %v207, %v204
    %v267 = vpack.c.bf16 %v215, %v212
    %v268 = vpack.c.bf16 %v223, %v220
    %v269 = vpack.c.bf16 %v231, %v228
    %v270 = vpack.c.bf16 %v239, %v236
    %v271 = vpack.c.bf16 %v247, %v244
    %v272 = vpack.c.bf16 %v255, %v252
    %v273 = vpack.c.bf16 %v263, %v260
    %v282 = vunpack.c.l.b16 %v266
    %v283 = vunpack.c.h.b16 %v266
    %v284 = vunpack.c.l.b16 %v267
    %v285 = vunpack.c.h.b16 %v267
    %v286 = vunpack.c.l.b16 %v268
    %v287 = vunpack.c.h.b16 %v268
    %v288 = vunpack.c.l.b16 %v269
    %v289 = vunpack.c.h.b16 %v269
    %v290 = vunpack.c.l.b16 %v270
    %v291 = vunpack.c.h.b16 %v270
    %v292 = vunpack.c.l.b16 %v271
    %v293 = vunpack.c.h.b16 %v271
    %v294 = vunpack.c.l.b16 %v272
    %v295 = vunpack.c.h.b16 %v272
    %v296 = vunpack.c.l.b16 %v273
    %v297 = vunpack.c.h.b16 %v273
    %v298 = vpack.c.b16 %v282, %v282
    %v299 = vpack.c.b16 %v283, %v283
    %v300 = vpack.c.b16 %v284, %v284
    %v301 = vpack.c.b16 %v285, %v285
    %v302 = vpack.c.b16 %v286, %v286
    %v303 = vpack.c.b16 %v287, %v287
    %v304 = vpack.c.b16 %v288, %v288
    %v305 = vpack.c.b16 %v289, %v289
    %v306 = vpack.c.b16 %v290, %v290
    %v307 = vpack.c.b16 %v291, %v291
    %v308 = vpack.c.b16 %v292, %v292
    %v309 = vpack.c.b16 %v293, %v293
    %v310 = vpack.c.b16 %v294, %v294
    %v311 = vpack.c.b16 %v295, %v295
    %v312 = vpack.c.b16 %v296, %v296
    %v313 = vpack.c.b16 %v297, %v297
    %330 = vst [vmem:[#allocation7] sm:$0xf] %v298
    %331 = vst [vmem:[#allocation7 + $0x4] sm:$0xf] %v299
    %332 = vst [vmem:[#allocation7 + $0x8] sm:$0xf] %v300
    %333 = vst [vmem:[#allocation7 + $0xc] sm:$0xf] %v301
    %334 = vst [vmem:[#allocation7 + $0x10] sm:$0xf] %v302
    %335 = vst [vmem:[#allocation7 + $0x14] sm:$0xf] %v303
    %336 = vst [vmem:[#allocation7 + $0x18] sm:$0xf] %v304
    %337 = vst [vmem:[#allocation7 + $0x1c] sm:$0xf] %v305
    %338 = vst [vmem:[#allocation7 + $0x20] sm:$0xf] %v306
    %339 = vst [vmem:[#allocation7 + $0x24] sm:$0xf] %v307
    %340 = vst [vmem:[#allocation7 + $0x28] sm:$0xf] %v308
    %341 = vst [vmem:[#allocation7 + $0x2c] sm:$0xf] %v309
    %342 = vst [vmem:[#allocation7 + $0x30] sm:$0xf] %v310
    %343 = vst [vmem:[#allocation7 + $0x34] sm:$0xf] %v311
    %344 = vst [vmem:[#allocation7 + $0x38] sm:$0xf] %v312
    %345 = vst [vmem:[#allocation7 + $0x3c] sm:$0xf] %v313
    // Predicated region
    $region18: #{tpu_custom_call.1} parent=1 // pred_check
      _
    $region19: #{tpu_custom_call.1} parent=1 // pred_check_branch
      %347 = sbr.rel (0) target = $region21
    $region20: #{tpu_custom_call.1} parent=1 // pred_region
      %s349 = ssub.s32 1024, 1024
      %350 = vsyncadd [#allocation4], %s349
      %s351 = sshll.u32 [#allocation7], 4
      %s352 = int_to_ptr.vmem [resolvable:$true] %s351
      %357 = dma.vmem_to_hbm [thread:$0]  %s352, 1024, %s2, [#allocation4], 64, 64, 4
    $region21: #{tpu_custom_call.1} parent=1 // pred_fallthru
      _
    // Predicated region
    $region22: #{tpu_custom_call.1} parent=1 // pred_check
      _
    $region23: #{tpu_custom_call.1} parent=1 // pred_check_branch
      %359 = sbr.rel (0) target = $region25
    $region24: #{tpu_custom_call.1} parent=1 // pred_region
      %360 = dma.done [#allocation4], 1024
    $region25: #{tpu_custom_call.1} parent=1 // pred_fallthru
      _
    %361 = vsyncpa [#allocation3], 1
    %362 = vsyncpa [#allocation6], 1
    %363 = vsyncpa [#allocation4], 1

</llo_original>
